<compile_context>
chip_gen: v7x
topology: tpu7x:2x2x1
jax: 0.10.0
libtpu: 0.0.40
codegen_flags: <defaults>
</compile_context>

<pallas_src>
import functools
import math

import jax
import jax.numpy as jnp
from jax import lax
from jax.experimental import pallas as pl
from jax.experimental.pallas import tpu as pltpu


def _round_up(x, m):
    return ((x + m - 1) // m) * m


def _round_down(x, m):
    return (x // m) * m


def _cdiv(a, b):
    return (a + b - 1) // b


def _device_info():
    """(physical VMEM bytes, #TensorCores seen by one Pallas grid).

    Introspection only: any failure falls back to conservative defaults
    (64 MiB VMEM, 1 TensorCore).  It never gates correctness.
    """
    vmem = 64 * 1024 * 1024
    n_tc = 1
    try:
        info = pltpu.get_tpu_info()
        vmem = int(getattr(info, "vmem_capacity_bytes", vmem))
    except Exception:
        pass
    try:
        kind = str(jax.devices()[0].device_kind).lower()
        # v7x (and megacore v4/v5p) shard "parallel" grid axes across 2 cores;
        # v5e/v6e have a single TensorCore, where splitting only adds overhead.
        if any(t in kind for t in ("v7", "tpu7", "v4", "v5p")):
            n_tc = 2
    except Exception:
        pass
    return vmem, n_tc


def _choose_fold(input_size, hidden_size, max_fold=16, max_bd_weight_bytes=8 << 20):
    """Rows-into-lanes fold factor F.

    Smallest F making both F*input_size and F*hidden_size multiples of 128
    (the lane width), so every matmul operand / activation / output tile is
    lane-dense.  Falls back to F=1 (plain layout) for awkward or already-big
    feature dims.
    """
    f_in = 128 // math.gcd(input_size, 128)
    f_hid = 128 // math.gcd(hidden_size, 128)
    f = f_in * f_hid // math.gcd(f_in, f_hid)
    if f == 1:
        return 1
    biggest = f * max(input_size, hidden_size)
    if f > max_fold or 4 * biggest * biggest > max_bd_weight_bytes:
        # TODO(synk): partial folds (multiple-of-8 lanes only) not implemented.
        return 1
    return f


def _choose_tiling(G, fd, fh, vmem_limit_bytes, n_tc):
    """Tile the folded-row axis.  Returns (tile_g, sub_g, n_sub, grid).

    tile_g : folded rows per pipelined DMA block (one grid step).
    sub_g  : inner compute chunk (bounds the live vreg/VMEM working set).
    """
    # Inner chunk sized so the widest activation chunk is ~32K f32 elements.
    sub_g = max(8, min(128, _round_down(32768 // max(fd, fh, 1), 8)))
    if G <= sub_g:
        # Single block covering the whole (small) problem; block dims equal
        # the full array dims, so no (8,128) divisibility issue.
        return G, G, 1, 1

    # Device-aware VMEM budget: x/enc/dec tiles are double-buffered, packed
    # weights are resident (constant index_map) but allocated double-buffered.
    bytes_per_row = 4 * (fd + fh + fd) * 2
    weight_bytes = 4 * (fd * fh + 4 * fh * fh + fh * fd + (5 * fh + fd)) * 2
    budget = max(bytes_per_row * sub_g,
                 int(0.8 * vmem_limit_bytes) - weight_bytes)
    cap = max(sub_g, min(8 * sub_g, _round_down(budget // bytes_per_row, sub_g)))

    # Balanced tiles: padding waste capped at < one sub_g chunk per step
    # instead of up to a whole (mostly empty) trailing tile.
    n_steps = _cdiv(G, cap)
    # Only split a single big tile when the chip really has >1 TensorCore
    # (v7x); on v5e/v6e the grid is a serial loop.
    if n_tc > 1 and n_steps < n_tc and G > n_tc * sub_g:
        n_steps = n_tc
    tile_g = _round_up(_cdiv(G, n_steps), sub_g)
    grid = _cdiv(G, tile_g)
    return tile_g, sub_g, tile_g // sub_g, grid


def _autoencoder_kernel(x_ref, w1_ref, wmid_ref, w3_ref, b_ref,
                        enc_ref, dec_ref, *, fh, fd, sub_g, n_sub):
    """One M-tile of the fused encode+decode path (6 matmuls + 4 ReLUs).

    Everything is in the rows-folded-into-lanes layout, so each matmul is
    (sub_g, >=128) x (>=128, >=128) with f32 accumulation and every store is
    an unmasked lane-dense vst.  The tile is processed in n_sub sub-chunks of
    sub_g folded rows to bound the live working set while the DMA block stays
    large.
    """
    # Hoist the (resident, constant-index) weight loads / static lane slices
    # out of the row loop.  Slice boundaries are multiples of 128 lanes.
    w1 = w1_ref[...]
    w3 = w3_ref[...]
    we2 = wmid_ref[:, 0 * fh:1 * fh]
    we3 = wmid_ref[:, 1 * fh:2 * fh]
    wd1 = wmid_ref[:, 2 * fh:3 * fh]
    wd2 = wmid_ref[:, 3 * fh:4 * fh]
    be1 = b_ref[:, 0 * fh:1 * fh]
    be2 = b_ref[:, 1 * fh:2 * fh]
    be3 = b_ref[:, 2 * fh:3 * fh]
    bd1 = b_ref[:, 3 * fh:4 * fh]
    bd2 = b_ref[:, 4 * fh:5 * fh]
    bd3 = b_ref[:, 5 * fh:5 * fh + fd]

    def mm(a, w):
        # Cast activations to the weight dtype (no-op in f32 mode; keeps the
        # MXU in bf16 when use_bf16=True) but always accumulate in f32.
        return jnp.dot(a.astype(w.dtype), w, preferred_element_type=jnp.float32)

    def sub_block(s, carry):
        r = pl.multiple_of(s * sub_g, sub_g)
        x = x_ref[pl.ds(r, sub_g), :]
        # encode: f_encoder3(relu(f_encoder2(relu(f_encoder1(x)))))
        h = jnp.maximum(mm(x, w1) + be1, 0.0)
        h = jnp.maximum(mm(h, we2) + be2, 0.0)
        enc = mm(h, we3) + be3
        enc_ref[pl.ds(r, sub_g), :] = enc.astype(enc_ref.dtype)
        # decode: f_decoder3(relu(f_decoder2(relu(f_decoder1(enc)))))
        d = jnp.maximum(mm(enc, wd1) + bd1, 0.0)
        d = jnp.maximum(mm(d, wd2) + bd2, 0.0)
        dec = mm(d, w3) + bd3
        dec_ref[pl.ds(r, sub_g), :] = dec.astype(dec_ref.dtype)
        return carry

    # Short fixed trip count (<= 8): unroll for LLO scheduler visibility.
    lax.fori_loop(0, n_sub, sub_block, 0, unroll=True)


def _pack_operands(params, fold, compute_dtype):
    """Build the 5 packed kernel operands.

    Block-diagonal expansion (kron with I_fold) implements the rows-into-lanes
    fold exactly: fold(x) @ blockdiag(W) == fold(x @ W).  The four (H,H)
    hidden weights are concatenated along lanes into one operand and all six
    biases (tiled across the fold) into another, cutting 13 pallas operands
    down to 6.
    """
    eye = jnp.eye(fold, dtype=jnp.float32)

    def bd(w):                       # (in, out) -> (fold*in, fold*out)
        return jnp.kron(eye, w) if fold > 1 else w

    def tb(b):                       # (1, out) -> (1, fold*out)
        return jnp.tile(b, (1, fold)) if fold > 1 else b

    w1 = bd(params["we1"]).astype(compute_dtype)
    wmid = jnp.concatenate(
        [bd(params["we2"]), bd(params["we3"]),
         bd(params["wd1"]), bd(params["wd2"])], axis=1).astype(compute_dtype)
    w3 = bd(params["wd3"]).astype(compute_dtype)
    bias = jnp.concatenate(
        [tb(params["be1"]), tb(params["be2"]), tb(params["be3"]),
         tb(params["bd1"]), tb(params["bd2"]), tb(params["bd3"])],
        axis=1).astype(jnp.float32)
    return w1, wmid, w3, bias


def linear_autoencoder_forward(states, params, *, use_bf16=False):
    """Pallas implementation of LinearAutoEncoder.forward (encode + decode).

    states: (B, S, input_size) float32
    params: dict of pre-transposed weights (in, out) and biases (1, out)
    returns: (encoded (B, S, hidden_size), decoded (B, S, input_size))
    """
    B, S, D = states.shape
    H = params["we1"].shape[1]
    M = B * S

    compute_dtype = jnp.bfloat16 if use_bf16 else jnp.float32
    fold = _choose_fold(D, H)
    fd, fh = fold * D, fold * H

    # Fold `fold` consecutive rows into the lane axis (free row-major reshape).
    x = states.reshape(M, D)
    G = _cdiv(M, fold)
    if G * fold != M:
        # TODO(synk): this pad is one extra HBM copy of x; a remainder-row
        # cleanup path would avoid it but never triggers for multiples of fold.
        x = jnp.pad(x, ((0, G * fold - M), (0, 0)))
    x = x.reshape(G, fd).astype(compute_dtype)

    w1, wmid, w3, bias = _pack_operands(params, fold, compute_dtype)

    vmem_bytes, n_tc = _device_info()
    vmem_limit = max(32 << 20, min(int(0.5 * vmem_bytes), 64 << 20))
    tile_g, sub_g, n_sub, grid = _choose_tiling(G, fd, fh, vmem_limit, n_tc)

    kernel = functools.partial(_autoencoder_kernel,
                               fh=fh, fd=fd, sub_g=sub_g, n_sub=n_sub)

    # Advisory cost estimate (actual hardware work in the folded layout).
    itemsize = jnp.dtype(compute_dtype).itemsize
    flops = 2 * G * (fd * fh + 4 * fh * fh + fh * fd)
    bytes_accessed = (G * fd * itemsize + 4 * G * (fh + fd)
                      + (int(w1.size) + int(wmid.size) + int(w3.size)) * itemsize
                      + int(bias.size) * 4)
    cost = pl.CostEstimate(flops=int(flops), transcendentals=0,
                           bytes_accessed=int(bytes_accessed))

    enc_f, dec_f = pl.pallas_call(
        kernel,
        out_shape=(
            jax.ShapeDtypeStruct((G, fh), jnp.float32),
            jax.ShapeDtypeStruct((G, fd), jnp.float32),
        ),
        grid_spec=pltpu.PrefetchScalarGridSpec(
            num_scalar_prefetch=0,
            grid=(grid,),
            in_specs=[
                pl.BlockSpec((tile_g, fd), lambda i: (i, 0)),   # folded x
                pl.BlockSpec(w1.shape, lambda i: (0, 0)),       # encoder1 weight
                pl.BlockSpec(wmid.shape, lambda i: (0, 0)),     # 4 hidden weights
                pl.BlockSpec(w3.shape, lambda i: (0, 0)),       # decoder3 weight
                pl.BlockSpec(bias.shape, lambda i: (0, 0)),     # all 6 biases
            ],
            out_specs=[
                pl.BlockSpec((tile_g, fh), lambda i: (i, 0)),   # folded encoded
                pl.BlockSpec((tile_g, fd), lambda i: (i, 0)),   # folded decoded
            ],
        ),
        compiler_params=pltpu.CompilerParams(
            dimension_semantics=("parallel",),
            vmem_limit_bytes=vmem_limit),
        cost_estimate=cost,
    )(x, w1, wmid, w3, bias)

    # Undo the lane fold (free row-major reshapes) and drop padded rows.
    enc = enc_f.reshape(G * fold, H)[:M].reshape(B, S, H)
    dec = dec_f.reshape(G * fold, D)[:M].reshape(B, S, D)
    return enc, dec


def init_params(key, input_size, hidden_size):
    """Deterministic init mimicking nn.Linear default (U(-1/sqrt(fan_in), +))."""
    def linear(key, fan_in, fan_out):
        kw, kb = jax.random.split(key)
        bound = 1.0 / jnp.sqrt(fan_in)
        # weight stored pre-transposed as (in, out); bias as (1, out)
        w = jax.random.uniform(kw, (fan_in, fan_out), jnp.float32, -bound, bound)
        b = jax.random.uniform(kb, (1, fan_out), jnp.float32, -bound, bound)
        return w, b

    keys = jax.random.split(key, 6)
    p = {}
    p["we1"], p["be1"] = linear(keys[0], input_size, hidden_size)   # f_encoder1
    p["we2"], p["be2"] = linear(keys[1], hidden_size, hidden_size)  # f_encoder2
    p["we3"], p["be3"] = linear(keys[2], hidden_size, hidden_size)  # f_encoder3
    p["wd1"], p["bd1"] = linear(keys[3], hidden_size, hidden_size)  # f_decoder1
    p["wd2"], p["bd2"] = linear(keys[4], hidden_size, hidden_size)  # f_decoder2
    p["wd3"], p["bd3"] = linear(keys[5], hidden_size, input_size)   # f_decoder3
    return p


def reference_forward(states, p):
    hi = jax.lax.Precision.HIGHEST

    def lin(x, w, b):
        return jnp.matmul(x, w, precision=hi) + b

    h = jax.nn.relu(lin(states, p["we1"], p["be1"]))
    h = jax.nn.relu(lin(h, p["we2"], p["be2"]))
    enc = lin(h, p["we3"], p["be3"])
    d = jax.nn.relu(lin(enc, p["wd1"], p["bd1"]))
    d = jax.nn.relu(lin(d, p["wd2"], p["bd2"]))
    dec = lin(d, p["wd3"], p["bd3"])
    return enc, dec


if __name__ == "__main__":
    key = jax.random.PRNGKey(0)
    k_param, k_small, k_big = jax.random.split(key, 3)

    input_size, hidden_size = 16, 32
    params = init_params(k_param, input_size, hidden_size)

    # --- small shape per spec: batch=2, seq=8, input=16, hidden=32 ---
    B, S = 2, 8
    states = jax.random.normal(k_small, (B, S, input_size), jnp.float32)
    enc, dec = jax.block_until_ready(linear_autoencoder_forward(states, params))
    enc_ref, dec_ref = reference_forward(states, params)
    assert enc.shape == (B, S, hidden_size)
    assert dec.shape == (B, S, input_size)
    assert jnp.allclose(enc, enc_ref, atol=1e-5, rtol=1e-5)
    assert jnp.allclose(dec, dec_ref, atol=1e-5, rtol=1e-5)

    # --- larger run exercising the multi-step pipelined grid + inner loop ---
    B2, S2 = 16, 1024
    states2 = jax.random.normal(k_big, (B2, S2, input_size), jnp.float32)
    enc2, dec2 = jax.block_until_ready(
        linear_autoencoder_forward(states2, params))
    enc2_ref, dec2_ref = reference_forward(states2, params)
    assert jnp.allclose(enc2, enc2_ref, atol=1e-4, rtol=1e-4)
    assert jnp.allclose(dec2, dec2_ref, atol=1e-4, rtol=1e-4)

    # --- optional bf16 MXU path (v6e/v7x): smoke test, loose tolerance ---
    enc3, dec3 = jax.block_until_ready(
        linear_autoencoder_forward(states, params, use_bf16=True))
    assert jnp.allclose(enc3, enc_ref, atol=1e-1, rtol=1e-1)
    assert jnp.allclose(dec3, dec_ref, atol=1e-1, rtol=1e-1)

    print("KERNEL_OK")
</pallas_src>

<mosaic_0001>
module attributes {stable_mosaic.version = 11 : i64} {
  func.func @_autoencoder_kernel(%arg0: i32, %arg1: memref<2x128xf32, #tpu.memory_space<vmem>>, %arg2: memref<128x256xf32, #tpu.memory_space<vmem>>, %arg3: memref<256x1024xf32, #tpu.memory_space<vmem>>, %arg4: memref<256x128xf32, #tpu.memory_space<vmem>>, %arg5: memref<1x1408xf32, #tpu.memory_space<vmem>>, %arg6: memref<2x256xf32, #tpu.memory_space<vmem>>, %arg7: memref<2x128xf32, #tpu.memory_space<vmem>>) attributes {dimension_semantics = [#tpu.dimension_semantics<parallel>], iteration_bounds = array<i64: 1>, scalar_prefetch = 0 : i64, scratch_operands = 0 : i64, tpu.core_type = #tpu.core_type<tc>, window_params = [{transform_indices = @transform_0, window_bounds = array<i64: 2, 128>}, {pipeline_mode = #tpu.pipeline_mode<synchronous>, transform_indices = @transform_1, window_bounds = array<i64: 128, 256>}, {pipeline_mode = #tpu.pipeline_mode<synchronous>, transform_indices = @transform_2, window_bounds = array<i64: 256, 1024>}, {pipeline_mode = #tpu.pipeline_mode<synchronous>, transform_indices = @transform_3, window_bounds = array<i64: 256, 128>}, {pipeline_mode = #tpu.pipeline_mode<synchronous>, transform_indices = @transform_4, window_bounds = array<i64: 1, 1408>}, {transform_indices = @transform_5, window_bounds = array<i64: 2, 256>}, {transform_indices = @transform_6, window_bounds = array<i64: 2, 128>}]} {
    %c0 = arith.constant 0 : index
    %c0_0 = arith.constant 0 : index
    %0 = vector.load %arg2[%c0, %c0_0] : memref<128x256xf32, #tpu.memory_space<vmem>>, vector<128x256xf32>
    %c0_1 = arith.constant 0 : index
    %c0_2 = arith.constant 0 : index
    %1 = vector.load %arg4[%c0_1, %c0_2] : memref<256x128xf32, #tpu.memory_space<vmem>>, vector<256x128xf32>
    %c0_3 = arith.constant 0 : index
    %c0_4 = arith.constant 0 : index
    %2 = vector.load %arg3[%c0_3, %c0_4] : memref<256x1024xf32, #tpu.memory_space<vmem>>, vector<256x256xf32>
    %c0_5 = arith.constant 0 : index
    %c256 = arith.constant 256 : index
    %3 = vector.load %arg3[%c0_5, %c256] : memref<256x1024xf32, #tpu.memory_space<vmem>>, vector<256x256xf32>
    %c0_6 = arith.constant 0 : index
    %c512 = arith.constant 512 : index
    %4 = vector.load %arg3[%c0_6, %c512] : memref<256x1024xf32, #tpu.memory_space<vmem>>, vector<256x256xf32>
    %c0_7 = arith.constant 0 : index
    %c768 = arith.constant 768 : index
    %5 = vector.load %arg3[%c0_7, %c768] : memref<256x1024xf32, #tpu.memory_space<vmem>>, vector<256x256xf32>
    %c0_8 = arith.constant 0 : index
    %c0_9 = arith.constant 0 : index
    %6 = vector.load %arg5[%c0_8, %c0_9] : memref<1x1408xf32, #tpu.memory_space<vmem>>, vector<1x256xf32>
    %c0_10 = arith.constant 0 : index
    %c256_11 = arith.constant 256 : index
    %7 = vector.load %arg5[%c0_10, %c256_11] : memref<1x1408xf32, #tpu.memory_space<vmem>>, vector<1x256xf32>
    %c0_12 = arith.constant 0 : index
    %c512_13 = arith.constant 512 : index
    %8 = vector.load %arg5[%c0_12, %c512_13] : memref<1x1408xf32, #tpu.memory_space<vmem>>, vector<1x256xf32>
    %c0_14 = arith.constant 0 : index
    %c768_15 = arith.constant 768 : index
    %9 = vector.load %arg5[%c0_14, %c768_15] : memref<1x1408xf32, #tpu.memory_space<vmem>>, vector<1x256xf32>
    %c0_16 = arith.constant 0 : index
    %c1024 = arith.constant 1024 : index
    %10 = vector.load %arg5[%c0_16, %c1024] : memref<1x1408xf32, #tpu.memory_space<vmem>>, vector<1x256xf32>
    %c0_17 = arith.constant 0 : index
    %c1280 = arith.constant 1280 : index
    %11 = vector.load %arg5[%c0_17, %c1280] : memref<1x1408xf32, #tpu.memory_space<vmem>>, vector<1x128xf32>
    %c0_i32 = arith.constant 0 : i32
    %c2_i32 = arith.constant 2 : i32
    %12 = arith.muli %c0_i32, %c2_i32 : i32
    %13 = tpu.assume_multiple %12, 2 : i32
    %14 = arith.index_cast %13 : i32 to index
    %c0_18 = arith.constant 0 : index
    %15 = vector.load %arg1[%14, %c0_18] : memref<2x128xf32, #tpu.memory_space<vmem>>, vector<2x128xf32>
    %cst = arith.constant dense<0.000000e+00> : vector<2x256xf32>
    %16 = tpu.matmul %15, %0, %cst {dimension_numbers = #tpu.dot_dimension_numbers<[1], [0], [0], [1], [0, 0, 1, 1], [], []>} : vector<2x128xf32>, vector<128x256xf32>, vector<2x256xf32> -> vector<2x256xf32>
    %17 = vector.broadcast %6 : vector<1x256xf32> to vector<2x256xf32>
    %18 = arith.addf %16, %17 : vector<2x256xf32>
    %cst_19 = arith.constant 0.000000e+00 : f32
    %19 = vector.broadcast %cst_19 : f32 to vector<2x256xf32>
    %20 = arith.maximumf %18, %19 : vector<2x256xf32>
    %cst_20 = arith.constant dense<0.000000e+00> : vector<2x256xf32>
    %21 = tpu.matmul %20, %2, %cst_20 {dimension_numbers = #tpu.dot_dimension_numbers<[1], [0], [0], [1], [0, 0, 1, 1], [], []>} : vector<2x256xf32>, vector<256x256xf32>, vector<2x256xf32> -> vector<2x256xf32>
    %22 = vector.broadcast %7 : vector<1x256xf32> to vector<2x256xf32>
    %23 = arith.addf %21, %22 : vector<2x256xf32>
    %cst_21 = arith.constant 0.000000e+00 : f32
    %24 = vector.broadcast %cst_21 : f32 to vector<2x256xf32>
    %25 = arith.maximumf %23, %24 : vector<2x256xf32>
    %cst_22 = arith.constant dense<0.000000e+00> : vector<2x256xf32>
    %26 = tpu.matmul %25, %3, %cst_22 {dimension_numbers = #tpu.dot_dimension_numbers<[1], [0], [0], [1], [0, 0, 1, 1], [], []>} : vector<2x256xf32>, vector<256x256xf32>, vector<2x256xf32> -> vector<2x256xf32>
    %27 = vector.broadcast %8 : vector<1x256xf32> to vector<2x256xf32>
    %28 = arith.addf %26, %27 : vector<2x256xf32>
    %29 = arith.index_cast %13 : i32 to index
    %c0_23 = arith.constant 0 : index
    %30 = vector.load %arg6[%29, %c0_23] : memref<2x256xf32, #tpu.memory_space<vmem>>, vector<2x256xf32>
    tpu.vector_store %arg6[%29, %c0_23], %28 {strides = array<i32>} : memref<2x256xf32, #tpu.memory_space<vmem>>, vector<2x256xf32>,
    %cst_24 = arith.constant dense<0.000000e+00> : vector<2x256xf32>
    %31 = tpu.matmul %28, %4, %cst_24 {dimension_numbers = #tpu.dot_dimension_numbers<[1], [0], [0], [1], [0, 0, 1, 1], [], []>} : vector<2x256xf32>, vector<256x256xf32>, vector<2x256xf32> -> vector<2x256xf32>
    %32 = vector.broadcast %9 : vector<1x256xf32> to vector<2x256xf32>
    %33 = arith.addf %31, %32 : vector<2x256xf32>
    %cst_25 = arith.constant 0.000000e+00 : f32
    %34 = vector.broadcast %cst_25 : f32 to vector<2x256xf32>
    %35 = arith.maximumf %33, %34 : vector<2x256xf32>
    %cst_26 = arith.constant dense<0.000000e+00> : vector<2x256xf32>
    %36 = tpu.matmul %35, %5, %cst_26 {dimension_numbers = #tpu.dot_dimension_numbers<[1], [0], [0], [1], [0, 0, 1, 1], [], []>} : vector<2x256xf32>, vector<256x256xf32>, vector<2x256xf32> -> vector<2x256xf32>
    %37 = vector.broadcast %10 : vector<1x256xf32> to vector<2x256xf32>
    %38 = arith.addf %36, %37 : vector<2x256xf32>
    %cst_27 = arith.constant 0.000000e+00 : f32
    %39 = vector.broadcast %cst_27 : f32 to vector<2x256xf32>
    %40 = arith.maximumf %38, %39 : vector<2x256xf32>
    %cst_28 = arith.constant dense<0.000000e+00> : vector<2x128xf32>
    %41 = tpu.matmul %40, %1, %cst_28 {dimension_numbers = #tpu.dot_dimension_numbers<[1], [0], [0], [1], [0, 0, 1, 1], [], []>} : vector<2x256xf32>, vector<256x128xf32>, vector<2x128xf32> -> vector<2x128xf32>
    %42 = vector.broadcast %11 : vector<1x128xf32> to vector<2x128xf32>
    %43 = arith.addf %41, %42 : vector<2x128xf32>
    %44 = arith.index_cast %13 : i32 to index
    %c0_29 = arith.constant 0 : index
    %45 = vector.load %arg7[%44, %c0_29] : memref<2x128xf32, #tpu.memory_space<vmem>>, vector<2x128xf32>
    tpu.vector_store %arg7[%44, %c0_29], %43 {strides = array<i32>} : memref<2x128xf32, #tpu.memory_space<vmem>>, vector<2x128xf32>,
    %c1_i32 = arith.constant 1 : i32
    return
  }
  func.func @transform_0(%arg0: i32) -> (i32, i32) {
    %c0_i32 = arith.constant 0 : i32
    %c0_i32_0 = arith.constant 0 : i32
    return %arg0, %c0_i32 : i32, i32
  }
  func.func @transform_1(%arg0: i32) -> (i32, i32) {
    %c0_i32 = arith.constant 0 : i32
    %c0_i32_0 = arith.constant 0 : i32
    %c0_i32_1 = arith.constant 0 : i32
    return %c0_i32, %c0_i32_0 : i32, i32
  }
  func.func @transform_2(%arg0: i32) -> (i32, i32) {
    %c0_i32 = arith.constant 0 : i32
    %c0_i32_0 = arith.constant 0 : i32
    %c0_i32_1 = arith.constant 0 : i32
    return %c0_i32, %c0_i32_0 : i32, i32
  }
  func.func @transform_3(%arg0: i32) -> (i32, i32) {
    %c0_i32 = arith.constant 0 : i32
    %c0_i32_0 = arith.constant 0 : i32
    %c0_i32_1 = arith.constant 0 : i32
    return %c0_i32, %c0_i32_0 : i32, i32
  }
  func.func @transform_4(%arg0: i32) -> (i32, i32) {
    %c0_i32 = arith.constant 0 : i32
    %c0_i32_0 = arith.constant 0 : i32
    %c0_i32_1 = arith.constant 0 : i32
    return %c0_i32, %c0_i32_0 : i32, i32
  }
  func.func @transform_5(%arg0: i32) -> (i32, i32) {
    %c0_i32 = arith.constant 0 : i32
    %c0_i32_0 = arith.constant 0 : i32
    return %arg0, %c0_i32 : i32, i32
  }
  func.func @transform_6(%arg0: i32) -> (i32, i32) {
    %c0_i32 = arith.constant 0 : i32
    %c0_i32_0 = arith.constant 0 : i32
    return %arg0, %c0_i32 : i32, i32
  }
}

</mosaic_0001>

<llo_original>
// kernel: tpu_custom_call.1
$region0: #{tpu_custom_call.1}
  #allocation0 [shape = 'u32[]', space=smem, size = 0x4, offset = 0x4, fixed_abs, tag = 'smem constant byte address 0x4 - core index']
  #allocation1 [shape = 'u32[144,128]{1,0:T(1,128)}', space=vmem, size = 0x12000, scoped, tag = 'internal scratch']
  %s0 = inlined_call_operand.hbm [shape: f32[2,128], index: 0, kind: input, shape index: {}]
  %s1 = inlined_call_operand.hbm [shape: f32[128,256], index: 1, kind: input, shape index: {}]
  %s2 = inlined_call_operand.hbm [shape: f32[256,1024], index: 2, kind: input, shape index: {}]
  %s3 = inlined_call_operand.hbm [shape: f32[256,128], index: 3, kind: input, shape index: {}]
  %s4 = inlined_call_operand.vmem [shape: f32[1,1408], index: 4, kind: input, shape index: {}]
  %s5 = inlined_call_operand.hbm [shape: f32[2,256], index: 5, kind: output, shape index: {0}]
  %s6 = inlined_call_operand.hbm [shape: f32[2,128], index: 6, kind: output, shape index: {1}]
  %7 = xla_tuple %s5, %s6
  %s8 = sld [smem:[#allocation0]]
  $region54: #{tpu_custom_call.1} parent=0
    _
  %s10 = ssub.s32 1, %s8
  %s11 = scalar_select 0, %s10, %s8
  $region1: #{tpu_custom_call.1} parent=0
    #allocation2 [shape = 'u8[1024]{0}', space=vmem, size = 0x400, scoped, tag = 'input window, operand 0, single buffered']
    #allocation3 [shape = 's32[1]{0}', space=sflag, size = 0x4, scoped, tag = 'scoped memory for tpu_custom_call.1']
    #allocation4 [shape = 's32[1]{0}', space=sflag, size = 0x4, scoped, tag = 'scoped memory for tpu_custom_call.1']
    #allocation5 [shape = 'u8[131072]{0}', space=vmem, size = 0x20000, scoped, tag = 'input window, operand 1, single buffered']
    #allocation6 [shape = 's32[1]{0}', space=sflag, size = 0x4, scoped, tag = 'scoped memory for tpu_custom_call.1']
    #allocation7 [shape = 'u8[1048576]{0}', space=vmem, size = 0x100000, scoped, tag = 'input window, operand 2, single buffered']
    #allocation8 [shape = 'u8[131072]{0}', space=vmem, size = 0x20000, scoped, tag = 'input window, operand 3, single buffered']
    #allocation9 [shape = 's32[1]{0}', space=sflag, size = 0x4, scoped, tag = 'scoped memory for tpu_custom_call.1']
    #allocation10 [shape = 'u8[2048]{0}', space=vmem, size = 0x800, scoped, tag = 'output window, operand 0, single buffered']
    #allocation11 [shape = 'u8[1024]{0}', space=vmem, size = 0x400, scoped, tag = 'output window, operand 1, single buffered']
    #allocation12 [shape = 's32[1]{0}', space=sflag, size = 0x4, scoped, tag = 'scoped memory for tpu_custom_call.1']
    %12 = vsyncpa [#allocation3], 0
    %13 = vsyncpa [#allocation6], 0
    %14 = vsyncpa [#allocation9], 0
    %15 = vsyncpa [#allocation4], 0
    %16 = vsyncpa [#allocation12], 0
    // Predicated region
    $region2: #{tpu_custom_call.1} parent=1 // pred_check
      _
    $region3: #{tpu_custom_call.1} parent=1 // pred_check_branch
      %18 = sbr.rel (0) target = $region5
    $region4: #{tpu_custom_call.1} parent=1 // pred_region
      %s20 = ssub.s32 32, 32
      %21 = vsyncadd [#allocation3], %s20
      %s23 = sshll.u32 [#allocation2], 4
      %s24 = int_to_ptr.vmem [resolvable:$true] %s23
      %26 = dma.hbm_to_vmem [thread:$0]  %s0, 32, %s24, [#allocation3]
    $region5: #{tpu_custom_call.1} parent=1 // pred_fallthru
      _
    // Predicated region
    $region6: #{tpu_custom_call.1} parent=1 // pred_check
      _
    $region7: #{tpu_custom_call.1} parent=1 // pred_check_branch
      %28 = sbr.rel (0) target = $region9
    $region8: #{tpu_custom_call.1} parent=1 // pred_region
      %s30 = ssub.s32 4096, 4096
      %31 = vsyncadd [#allocation6], %s30
      %s32 = sshll.u32 [#allocation5], 4
      %s33 = int_to_ptr.vmem [resolvable:$true] %s32
      %38 = dma.hbm_to_vmem [thread:$0]  %s1, 4096, %s33, [#allocation6], 256, 256, 16
    $region9: #{tpu_custom_call.1} parent=1 // pred_fallthru
      _
    // Predicated region
    $region10: #{tpu_custom_call.1} parent=1 // pred_check
      _
    $region11: #{tpu_custom_call.1} parent=1 // pred_check_branch
      %40 = sbr.rel (0) target = $region13
    $region12: #{tpu_custom_call.1} parent=1 // pred_region
      %s42 = ssub.s32 32768, 32768
      %43 = vsyncadd [#allocation6], %s42
      %s44 = sshll.u32 [#allocation7], 4
      %s45 = int_to_ptr.vmem [resolvable:$true] %s44
      %50 = dma.hbm_to_vmem [thread:$0]  %s2, 32768, %s45, [#allocation6], 1024, 1024, 64
    $region13: #{tpu_custom_call.1} parent=1 // pred_fallthru
      _
    // Predicated region
    $region14: #{tpu_custom_call.1} parent=1 // pred_check
      _
    $region15: #{tpu_custom_call.1} parent=1 // pred_check_branch
      %52 = sbr.rel (0) target = $region17
    $region16: #{tpu_custom_call.1} parent=1 // pred_region
      %s54 = ssub.s32 4096, 4096
      %55 = vsyncadd [#allocation9], %s54
      %s56 = sshll.u32 [#allocation8], 4
      %s57 = int_to_ptr.vmem [resolvable:$true] %s56
      %62 = dma.hbm_to_vmem [thread:$0]  %s3, 4096, %s57, [#allocation9], 128, 128, 8
    $region17: #{tpu_custom_call.1} parent=1 // pred_fallthru
      _
    // Predicated region
    $region18: #{tpu_custom_call.1} parent=1 // pred_check
      _
    $region19: #{tpu_custom_call.1} parent=1 // pred_check_branch
      %64 = sbr.rel (0) target = $region21
    $region20: #{tpu_custom_call.1} parent=1 // pred_region
      _
    $region21: #{tpu_custom_call.1} parent=1 // pred_fallthru
      _
    // Predicated region
    $region22: #{tpu_custom_call.1} parent=1 // pred_check
      _
    $region23: #{tpu_custom_call.1} parent=1 // pred_check_branch
      %66 = sbr.rel (0) target = $region25
    $region24: #{tpu_custom_call.1} parent=1 // pred_region
      %67 = dma.done [#allocation3], 32
    $region25: #{tpu_custom_call.1} parent=1 // pred_fallthru
      _
    // Predicated region
    $region26: #{tpu_custom_call.1} parent=1 // pred_check
      _
    $region27: #{tpu_custom_call.1} parent=1 // pred_check_branch
      %69 = sbr.rel (0) target = $region29
    $region28: #{tpu_custom_call.1} parent=1 // pred_region
      %70 = dma.done [#allocation6], 4096
    $region29: #{tpu_custom_call.1} parent=1 // pred_fallthru
      _
    // Predicated region
    $region30: #{tpu_custom_call.1} parent=1 // pred_check
      _
    $region31: #{tpu_custom_call.1} parent=1 // pred_check_branch
      %72 = sbr.rel (0) target = $region33
    $region32: #{tpu_custom_call.1} parent=1 // pred_region
      %73 = dma.done [#allocation6], 32768
    $region33: #{tpu_custom_call.1} parent=1 // pred_fallthru
      _
    // Predicated region
    $region34: #{tpu_custom_call.1} parent=1 // pred_check
      _
    $region35: #{tpu_custom_call.1} parent=1 // pred_check_branch
      %75 = sbr.rel (0) target = $region37
    $region36: #{tpu_custom_call.1} parent=1 // pred_region
      %76 = dma.done [#allocation9], 4096
    $region37: #{tpu_custom_call.1} parent=1 // pred_fallthru
      _
    %v77 = vld [vmem:[#allocation5] sm:$0xff]
    %v78 = vld [vmem:[#allocation5 + $0x8] sm:$0xff]
    %v79 = vld [vmem:[#allocation5 + $0x10] sm:$0xff]
    %v80 = vld [vmem:[#allocation5 + $0x18] sm:$0xff]
    %v81 = vld [vmem:[#allocation5 + $0x20] sm:$0xff]
    %v82 = vld [vmem:[#allocation5 + $0x28] sm:$0xff]
    %v83 = vld [vmem:[#allocation5 + $0x30] sm:$0xff]
    %v84 = vld [vmem:[#allocation5 + $0x38] sm:$0xff]
    %v85 = vld [vmem:[#allocation5 + $0x40] sm:$0xff]
    %v86 = vld [vmem:[#allocation5 + $0x48] sm:$0xff]
    %v87 = vld [vmem:[#allocation5 + $0x50] sm:$0xff]
    %v88 = vld [vmem:[#allocation5 + $0x58] sm:$0xff]
    %v89 = vld [vmem:[#allocation5 + $0x60] sm:$0xff]
    %v90 = vld [vmem:[#allocation5 + $0x68] sm:$0xff]
    %v91 = vld [vmem:[#allocation5 + $0x70] sm:$0xff]
    %v92 = vld [vmem:[#allocation5 + $0x78] sm:$0xff]
    %v93 = vld [vmem:[#allocation5 + $0x80] sm:$0xff]
    %v94 = vld [vmem:[#allocation5 + $0x88] sm:$0xff]
    %v95 = vld [vmem:[#allocation5 + $0x90] sm:$0xff]
    %v96 = vld [vmem:[#allocation5 + $0x98] sm:$0xff]
    %v97 = vld [vmem:[#allocation5 + $0xa0] sm:$0xff]
    %v98 = vld [vmem:[#allocation5 + $0xa8] sm:$0xff]
    %v99 = vld [vmem:[#allocation5 + $0xb0] sm:$0xff]
    %v100 = vld [vmem:[#allocation5 + $0xb8] sm:$0xff]
    %v101 = vld [vmem:[#allocation5 + $0xc0] sm:$0xff]
    %v102 = vld [vmem:[#allocation5 + $0xc8] sm:$0xff]
    %v103 = vld [vmem:[#allocation5 + $0xd0] sm:$0xff]
    %v104 = vld [vmem:[#allocation5 + $0xd8] sm:$0xff]
    %v105 = vld [vmem:[#allocation5 + $0xe0] sm:$0xff]
    %v106 = vld [vmem:[#allocation5 + $0xe8] sm:$0xff]
    %v107 = vld [vmem:[#allocation5 + $0xf0] sm:$0xff]
    %v108 = vld [vmem:[#allocation5 + $0xf8] sm:$0xff]
    %v109 = vld [vmem:[#allocation8] sm:$0xff]
    %v110 = vld [vmem:[#allocation8 + $0x8] sm:$0xff]
    %v111 = vld [vmem:[#allocation8 + $0x10] sm:$0xff]
    %v112 = vld [vmem:[#allocation8 + $0x18] sm:$0xff]
    %v113 = vld [vmem:[#allocation8 + $0x20] sm:$0xff]
    %v114 = vld [vmem:[#allocation8 + $0x28] sm:$0xff]
    %v115 = vld [vmem:[#allocation8 + $0x30] sm:$0xff]
    %v116 = vld [vmem:[#allocation8 + $0x38] sm:$0xff]
    %v117 = vld [vmem:[#allocation8 + $0x40] sm:$0xff]
    %v118 = vld [vmem:[#allocation8 + $0x48] sm:$0xff]
    %v119 = vld [vmem:[#allocation8 + $0x50] sm:$0xff]
    %v120 = vld [vmem:[#allocation8 + $0x58] sm:$0xff]
    %v121 = vld [vmem:[#allocation8 + $0x60] sm:$0xff]
    %v122 = vld [vmem:[#allocation8 + $0x68] sm:$0xff]
    %v123 = vld [vmem:[#allocation8 + $0x70] sm:$0xff]
    %v124 = vld [vmem:[#allocation8 + $0x78] sm:$0xff]
    %v125 = vld [vmem:[#allocation8 + $0x80] sm:$0xff]
    %v126 = vld [vmem:[#allocation8 + $0x88] sm:$0xff]
    %v127 = vld [vmem:[#allocation8 + $0x90] sm:$0xff]
    %v128 = vld [vmem:[#allocation8 + $0x98] sm:$0xff]
    %v129 = vld [vmem:[#allocation8 + $0xa0] sm:$0xff]
    %v130 = vld [vmem:[#allocation8 + $0xa8] sm:$0xff]
    %v131 = vld [vmem:[#allocation8 + $0xb0] sm:$0xff]
    %v132 = vld [vmem:[#allocation8 + $0xb8] sm:$0xff]
    %v133 = vld [vmem:[#allocation8 + $0xc0] sm:$0xff]
    %v134 = vld [vmem:[#allocation8 + $0xc8] sm:$0xff]
    %v135 = vld [vmem:[#allocation8 + $0xd0] sm:$0xff]
    %v136 = vld [vmem:[#allocation8 + $0xd8] sm:$0xff]
    %v137 = vld [vmem:[#allocation8 + $0xe0] sm:$0xff]
    %v138 = vld [vmem:[#allocation8 + $0xe8] sm:$0xff]
    %v139 = vld [vmem:[#allocation8 + $0xf0] sm:$0xff]
    %v140 = vld [vmem:[#allocation8 + $0xf8] sm:$0xff]
    %v141 = vld [vmem:[#allocation7] sm:$0xff]
    %v142 = vld [vmem:[#allocation7 + $0x8] sm:$0xff]
    %v143 = vld [vmem:[#allocation7 + $0x40] sm:$0xff]
    %v144 = vld [vmem:[#allocation7 + $0x48] sm:$0xff]
    %v145 = vld [vmem:[#allocation7 + $0x80] sm:$0xff]
    %v146 = vld [vmem:[#allocation7 + $0x88] sm:$0xff]
    %v147 = vld [vmem:[#allocation7 + $0xc0] sm:$0xff]
    %v148 = vld [vmem:[#allocation7 + $0xc8] sm:$0xff]
    %v149 = vld [vmem:[#allocation7 + $0x100] sm:$0xff]
    %v150 = vld [vmem:[#allocation7 + $0x108] sm:$0xff]
    %v151 = vld [vmem:[#allocation7 + $0x140] sm:$0xff]
    %v152 = vld [vmem:[#allocation7 + $0x148] sm:$0xff]
    %v153 = vld [vmem:[#allocation7 + $0x180] sm:$0xff]
    %v154 = vld [vmem:[#allocation7 + $0x188] sm:$0xff]
    %v155 = vld [vmem:[#allocation7 + $0x1c0] sm:$0xff]
    %v156 = vld [vmem:[#allocation7 + $0x1c8] sm:$0xff]
    %v157 = vld [vmem:[#allocation7 + $0x200] sm:$0xff]
    %v158 = vld [vmem:[#allocation7 + $0x208] sm:$0xff]
    %v159 = vld [vmem:[#allocation7 + $0x240] sm:$0xff]
    %v160 = vld [vmem:[#allocation7 + $0x248] sm:$0xff]
    %v161 = vld [vmem:[#allocation7 + $0x280] sm:$0xff]
    %v162 = vld [vmem:[#allocation7 + $0x288] sm:$0xff]
    %v163 = vld [vmem:[#allocation7 + $0x2c0] sm:$0xff]
    %v164 = vld [vmem:[#allocation7 + $0x2c8] sm:$0xff]
    %v165 = vld [vmem:[#allocation7 + $0x300] sm:$0xff]
    %v166 = vld [vmem:[#allocation7 + $0x308] sm:$0xff]
    %v167 = vld [vmem:[#allocation7 + $0x340] sm:$0xff]
    %v168 = vld [vmem:[#allocation7 + $0x348] sm:$0xff]
    %v169 = vld [vmem:[#allocation7 + $0x380] sm:$0xff]
    %v170 = vld [vmem:[#allocation7 + $0x388] sm:$0xff]
    %v171 = vld [vmem:[#allocation7 + $0x3c0] sm:$0xff]
    %v172 = vld [vmem:[#allocation7 + $0x3c8] sm:$0xff]
    %v173 = vld [vmem:[#allocation7 + $0x400] sm:$0xff]
    %v174 = vld [vmem:[#allocation7 + $0x408] sm:$0xff]
    %v175 = vld [vmem:[#allocation7 + $0x440] sm:$0xff]
    %v176 = vld [vmem:[#allocation7 + $0x448] sm:$0xff]
    %v177 = vld [vmem:[#allocation7 + $0x480] sm:$0xff]
    %v178 = vld [vmem:[#allocation7 + $0x488] sm:$0xff]
    %v179 = vld [vmem:[#allocation7 + $0x4c0] sm:$0xff]
    %v180 = vld [vmem:[#allocation7 + $0x4c8] sm:$0xff]
    %v181 = vld [vmem:[#allocation7 + $0x500] sm:$0xff]
    %v182 = vld [vmem:[#allocation7 + $0x508] sm:$0xff]
    %v183 = vld [vmem:[#allocation7 + $0x540] sm:$0xff]
    %v184 = vld [vmem:[#allocation7 + $0x548] sm:$0xff]
    %v185 = vld [vmem:[#allocation7 + $0x580] sm:$0xff]
    %v186 = vld [vmem:[#allocation7 + $0x588] sm:$0xff]
    %v187 = vld [vmem:[#allocation7 + $0x5c0] sm:$0xff]
    %v188 = vld [vmem:[#allocation7 + $0x5c8] sm:$0xff]
    %v189 = vld [vmem:[#allocation7 + $0x600] sm:$0xff]
    %v190 = vld [vmem:[#allocation7 + $0x608] sm:$0xff]
    %v191 = vld [vmem:[#allocation7 + $0x640] sm:$0xff]
    %v192 = vld [vmem:[#allocation7 + $0x648] sm:$0xff]
    %v193 = vld [vmem:[#allocation7 + $0x680] sm:$0xff]
    %v194 = vld [vmem:[#allocation7 + $0x688] sm:$0xff]
    %v195 = vld [vmem:[#allocation7 + $0x6c0] sm:$0xff]
    %v196 = vld [vmem:[#allocation7 + $0x6c8] sm:$0xff]
    %v197 = vld [vmem:[#allocation7 + $0x700] sm:$0xff]
    %v198 = vld [vmem:[#allocation7 + $0x708] sm:$0xff]
    %v199 = vld [vmem:[#allocation7 + $0x740] sm:$0xff]
    %v200 = vld [vmem:[#allocation7 + $0x748] sm:$0xff]
    %v201 = vld [vmem:[#allocation7 + $0x780] sm:$0xff]
    %v202 = vld [vmem:[#allocation7 + $0x788] sm:$0xff]
    %v203 = vld [vmem:[#allocation7 + $0x7c0] sm:$0xff]
    %v204 = vld [vmem:[#allocation7 + $0x7c8] sm:$0xff]
    %v205 = vld [vmem:[#allocation7 + $0x10] sm:$0xff]
    %v206 = vld [vmem:[#allocation7 + $0x18] sm:$0xff]
    %v207 = vld [vmem:[#allocation7 + $0x50] sm:$0xff]
    %v208 = vld [vmem:[#allocation7 + $0x58] sm:$0xff]
    %v209 = vld [vmem:[#allocation7 + $0x90] sm:$0xff]
    %v210 = vld [vmem:[#allocation7 + $0x98] sm:$0xff]
    %v211 = vld [vmem:[#allocation7 + $0xd0] sm:$0xff]
    %v212 = vld [vmem:[#allocation7 + $0xd8] sm:$0xff]
    %v213 = vld [vmem:[#allocation7 + $0x110] sm:$0xff]
    %v214 = vld [vmem:[#allocation7 + $0x118] sm:$0xff]
    %v215 = vld [vmem:[#allocation7 + $0x150] sm:$0xff]
    %v216 = vld [vmem:[#allocation7 + $0x158] sm:$0xff]
    %v217 = vld [vmem:[#allocation7 + $0x190] sm:$0xff]
    %v218 = vld [vmem:[#allocation7 + $0x198] sm:$0xff]
    %v219 = vld [vmem:[#allocation7 + $0x1d0] sm:$0xff]
    %v220 = vld [vmem:[#allocation7 + $0x1d8] sm:$0xff]
    %v221 = vld [vmem:[#allocation7 + $0x210] sm:$0xff]
    %v222 = vld [vmem:[#allocation7 + $0x218] sm:$0xff]
    %v223 = vld [vmem:[#allocation7 + $0x250] sm:$0xff]
    %v224 = vld [vmem:[#allocation7 + $0x258] sm:$0xff]
    %v225 = vld [vmem:[#allocation7 + $0x290] sm:$0xff]
    %v226 = vld [vmem:[#allocation7 + $0x298] sm:$0xff]
    %v227 = vld [vmem:[#allocation7 + $0x2d0] sm:$0xff]
    %v228 = vld [vmem:[#allocation7 + $0x2d8] sm:$0xff]
    %v229 = vld [vmem:[#allocation7 + $0x310] sm:$0xff]
    %v230 = vld [vmem:[#allocation7 + $0x318] sm:$0xff]
    %v231 = vld [vmem:[#allocation7 + $0x350] sm:$0xff]
    %v232 = vld [vmem:[#allocation7 + $0x358] sm:$0xff]
    %v233 = vld [vmem:[#allocation7 + $0x390] sm:$0xff]
    %v234 = vld [vmem:[#allocation7 + $0x398] sm:$0xff]
    %v235 = vld [vmem:[#allocation7 + $0x3d0] sm:$0xff]
    %v236 = vld [vmem:[#allocation7 + $0x3d8] sm:$0xff]
    %v237 = vld [vmem:[#allocation7 + $0x410] sm:$0xff]
    %v238 = vld [vmem:[#allocation7 + $0x418] sm:$0xff]
    %v239 = vld [vmem:[#allocation7 + $0x450] sm:$0xff]
    %v240 = vld [vmem:[#allocation7 + $0x458] sm:$0xff]
    %v241 = vld [vmem:[#allocation7 + $0x490] sm:$0xff]
    %v242 = vld [vmem:[#allocation7 + $0x498] sm:$0xff]
    %v243 = vld [vmem:[#allocation7 + $0x4d0] sm:$0xff]
    %v244 = vld [vmem:[#allocation7 + $0x4d8] sm:$0xff]
    %v245 = vld [vmem:[#allocation7 + $0x510] sm:$0xff]
    %v246 = vld [vmem:[#allocation7 + $0x518] sm:$0xff]
    %v247 = vld [vmem:[#allocation7 + $0x550] sm:$0xff]
    %v248 = vld [vmem:[#allocation7 + $0x558] sm:$0xff]
    %v249 = vld [vmem:[#allocation7 + $0x590] sm:$0xff]
    %v250 = vld [vmem:[#allocation7 + $0x598] sm:$0xff]
    %v251 = vld [vmem:[#allocation7 + $0x5d0] sm:$0xff]
    %v252 = vld [vmem:[#allocation7 + $0x5d8] sm:$0xff]
    %v253 = vld [vmem:[#allocation7 + $0x610] sm:$0xff]
    %v254 = vld [vmem:[#allocation7 + $0x618] sm:$0xff]
    %v255 = vld [vmem:[#allocation7 + $0x650] sm:$0xff]
    %v256 = vld [vmem:[#allocation7 + $0x658] sm:$0xff]
    %v257 = vld [vmem:[#allocation7 + $0x690] sm:$0xff]
    %v258 = vld [vmem:[#allocation7 + $0x698] sm:$0xff]
    %v259 = vld [vmem:[#allocation7 + $0x6d0] sm:$0xff]
    %v260 = vld [vmem:[#allocation7 + $0x6d8] sm:$0xff]
    %v261 = vld [vmem:[#allocation7 + $0x710] sm:$0xff]
    %v262 = vld [vmem:[#allocation7 + $0x718] sm:$0xff]
    %v263 = vld [vmem:[#allocation7 + $0x750] sm:$0xff]
    %v264 = vld [vmem:[#allocation7 + $0x758] sm:$0xff]
    %v265 = vld [vmem:[#allocation7 + $0x790] sm:$0xff]
    %v266 = vld [vmem:[#allocation7 + $0x798] sm:$0xff]
    %v267 = vld [vmem:[#allocation7 + $0x7d0] sm:$0xff]
    %v268 = vld [vmem:[#allocation7 + $0x7d8] sm:$0xff]
    %v269 = vld [vmem:[#allocation7 + $0x20] sm:$0xff]
    %v270 = vld [vmem:[#allocation7 + $0x28] sm:$0xff]
    %v271 = vld [vmem:[#allocation7 + $0x60] sm:$0xff]
    %v272 = vld [vmem:[#allocation7 + $0x68] sm:$0xff]
    %v273 = vld [vmem:[#allocation7 + $0xa0] sm:$0xff]
    %v274 = vld [vmem:[#allocation7 + $0xa8] sm:$0xff]
    %v275 = vld [vmem:[#allocation7 + $0xe0] sm:$0xff]
    %v276 = vld [vmem:[#allocation7 + $0xe8] sm:$0xff]
    %v277 = vld [vmem:[#allocation7 + $0x120] sm:$0xff]
    %v278 = vld [vmem:[#allocation7 + $0x128] sm:$0xff]
    %v279 = vld [vmem:[#allocation7 + $0x160] sm:$0xff]
    %v280 = vld [vmem:[#allocation7 + $0x168] sm:$0xff]
    %v281 = vld [vmem:[#allocation7 + $0x1a0] sm:$0xff]
    %v282 = vld [vmem:[#allocation7 + $0x1a8] sm:$0xff]
    %v283 = vld [vmem:[#allocation7 + $0x1e0] sm:$0xff]
    %v284 = vld [vmem:[#allocation7 + $0x1e8] sm:$0xff]
    %v285 = vld [vmem:[#allocation7 + $0x220] sm:$0xff]
    %v286 = vld [vmem:[#allocation7 + $0x228] sm:$0xff]
    %v287 = vld [vmem:[#allocation7 + $0x260] sm:$0xff]
    %v288 = vld [vmem:[#allocation7 + $0x268] sm:$0xff]
    %v289 = vld [vmem:[#allocation7 + $0x2a0] sm:$0xff]
    %v290 = vld [vmem:[#allocation7 + $0x2a8] sm:$0xff]
    %v291 = vld [vmem:[#allocation7 + $0x2e0] sm:$0xff]
    %v292 = vld [vmem:[#allocation7 + $0x2e8] sm:$0xff]
    %v293 = vld [vmem:[#allocation7 + $0x320] sm:$0xff]
    %v294 = vld [vmem:[#allocation7 + $0x328] sm:$0xff]
    %v295 = vld [vmem:[#allocation7 + $0x360] sm:$0xff]
    %v296 = vld [vmem:[#allocation7 + $0x368] sm:$0xff]
    %v297 = vld [vmem:[#allocation7 + $0x3a0] sm:$0xff]
    %v298 = vld [vmem:[#allocation7 + $0x3a8] sm:$0xff]
    %v299 = vld [vmem:[#allocation7 + $0x3e0] sm:$0xff]
    %v300 = vld [vmem:[#allocation7 + $0x3e8] sm:$0xff]
    %v301 = vld [vmem:[#allocation7 + $0x420] sm:$0xff]
    %v302 = vld [vmem:[#allocation7 + $0x428] sm:$0xff]
    %v303 = vld [vmem:[#allocation7 + $0x460] sm:$0xff]
    %v304 = vld [vmem:[#allocation7 + $0x468] sm:$0xff]
    %v305 = vld [vmem:[#allocation7 + $0x4a0] sm:$0xff]
    %v306 = vld [vmem:[#allocation7 + $0x4a8] sm:$0xff]
    %v307 = vld [vmem:[#allocation7 + $0x4e0] sm:$0xff]
    %v308 = vld [vmem:[#allocation7 + $0x4e8] sm:$0xff]
    %v309 = vld [vmem:[#allocation7 + $0x520] sm:$0xff]
    %v310 = vld [vmem:[#allocation7 + $0x528] sm:$0xff]
    %v311 = vld [vmem:[#allocation7 + $0x560] sm:$0xff]
    %v312 = vld [vmem:[#allocation7 + $0x568] sm:$0xff]
    %v313 = vld [vmem:[#allocation7 + $0x5a0] sm:$0xff]
    %v314 = vld [vmem:[#allocation7 + $0x5a8] sm:$0xff]
    %v315 = vld [vmem:[#allocation7 + $0x5e0] sm:$0xff]
    %v316 = vld [vmem:[#allocation7 + $0x5e8] sm:$0xff]
    %v317 = vld [vmem:[#allocation7 + $0x620] sm:$0xff]
    %v318 = vld [vmem:[#allocation7 + $0x628] sm:$0xff]
    %v319 = vld [vmem:[#allocation7 + $0x660] sm:$0xff]
    %v320 = vld [vmem:[#allocation7 + $0x668] sm:$0xff]
    %v321 = vld [vmem:[#allocation7 + $0x6a0] sm:$0xff]
    %v322 = vld [vmem:[#allocation7 + $0x6a8] sm:$0xff]
    %v323 = vld [vmem:[#allocation7 + $0x6e0] sm:$0xff]
    %v324 = vld [vmem:[#allocation7 + $0x6e8] sm:$0xff]
    %v325 = vld [vmem:[#allocation7 + $0x720] sm:$0xff]
    %v326 = vld [vmem:[#allocation7 + $0x728] sm:$0xff]
    %v327 = vld [vmem:[#allocation7 + $0x760] sm:$0xff]
    %v328 = vld [vmem:[#allocation7 + $0x768] sm:$0xff]
    %v329 = vld [vmem:[#allocation7 + $0x7a0] sm:$0xff]
    %v330 = vld [vmem:[#allocation7 + $0x7a8] sm:$0xff]
    %v331 = vld [vmem:[#allocation7 + $0x7e0] sm:$0xff]
    %v332 = vld [vmem:[#allocation7 + $0x7e8] sm:$0xff]
    %v333 = vld [vmem:[#allocation7 + $0x30] sm:$0xff]
    %v334 = vld [vmem:[#allocation7 + $0x38] sm:$0xff]
    %v335 = vld [vmem:[#allocation7 + $0x70] sm:$0xff]
    %v336 = vld [vmem:[#allocation7 + $0x78] sm:$0xff]
    %v337 = vld [vmem:[#allocation7 + $0xb0] sm:$0xff]
    %v338 = vld [vmem:[#allocation7 + $0xb8] sm:$0xff]
    %v339 = vld [vmem:[#allocation7 + $0xf0] sm:$0xff]
    %v340 = vld [vmem:[#allocation7 + $0xf8] sm:$0xff]
    %v341 = vld [vmem:[#allocation7 + $0x130] sm:$0xff]
    %v342 = vld [vmem:[#allocation7 + $0x138] sm:$0xff]
    %v343 = vld [vmem:[#allocation7 + $0x170] sm:$0xff]
    %v344 = vld [vmem:[#allocation7 + $0x178] sm:$0xff]
    %v345 = vld [vmem:[#allocation7 + $0x1b0] sm:$0xff]
    %v346 = vld [vmem:[#allocation7 + $0x1b8] sm:$0xff]
    %v347 = vld [vmem:[#allocation7 + $0x1f0] sm:$0xff]
    %v348 = vld [vmem:[#allocation7 + $0x1f8] sm:$0xff]
    %v349 = vld [vmem:[#allocation7 + $0x230] sm:$0xff]
    %v350 = vld [vmem:[#allocation7 + $0x238] sm:$0xff]
    %v351 = vld [vmem:[#allocation7 + $0x270] sm:$0xff]
    %v352 = vld [vmem:[#allocation7 + $0x278] sm:$0xff]
    %v353 = vld [vmem:[#allocation7 + $0x2b0] sm:$0xff]
    %v354 = vld [vmem:[#allocation7 + $0x2b8] sm:$0xff]
    %v355 = vld [vmem:[#allocation7 + $0x2f0] sm:$0xff]
    %v356 = vld [vmem:[#allocation7 + $0x2f8] sm:$0xff]
    %v357 = vld [vmem:[#allocation7 + $0x330] sm:$0xff]
    %v358 = vld [vmem:[#allocation7 + $0x338] sm:$0xff]
    %v359 = vld [vmem:[#allocation7 + $0x370] sm:$0xff]
    %v360 = vld [vmem:[#allocation7 + $0x378] sm:$0xff]
    %v361 = vld [vmem:[#allocation7 + $0x3b0] sm:$0xff]
    %v362 = vld [vmem:[#allocation7 + $0x3b8] sm:$0xff]
    %v363 = vld [vmem:[#allocation7 + $0x3f0] sm:$0xff]
    %v364 = vld [vmem:[#allocation7 + $0x3f8] sm:$0xff]
    %v365 = vld [vmem:[#allocation7 + $0x430] sm:$0xff]
    %v366 = vld [vmem:[#allocation7 + $0x438] sm:$0xff]
    %v367 = vld [vmem:[#allocation7 + $0x470] sm:$0xff]
    %v368 = vld [vmem:[#allocation7 + $0x478] sm:$0xff]
    %v369 = vld [vmem:[#allocation7 + $0x4b0] sm:$0xff]
    %v370 = vld [vmem:[#allocation7 + $0x4b8] sm:$0xff]
    %v371 = vld [vmem:[#allocation7 + $0x4f0] sm:$0xff]
    %v372 = vld [vmem:[#allocation7 + $0x4f8] sm:$0xff]
    %v373 = vld [vmem:[#allocation7 + $0x530] sm:$0xff]
    %v374 = vld [vmem:[#allocation7 + $0x538] sm:$0xff]
    %v375 = vld [vmem:[#allocation7 + $0x570] sm:$0xff]
    %v376 = vld [vmem:[#allocation7 + $0x578] sm:$0xff]
    %v377 = vld [vmem:[#allocation7 + $0x5b0] sm:$0xff]
    %v378 = vld [vmem:[#allocation7 + $0x5b8] sm:$0xff]
    %v379 = vld [vmem:[#allocation7 + $0x5f0] sm:$0xff]
    %v380 = vld [vmem:[#allocation7 + $0x5f8] sm:$0xff]
    %v381 = vld [vmem:[#allocation7 + $0x630] sm:$0xff]
    %v382 = vld [vmem:[#allocation7 + $0x638] sm:$0xff]
    %v383 = vld [vmem:[#allocation7 + $0x670] sm:$0xff]
    %v384 = vld [vmem:[#allocation7 + $0x678] sm:$0xff]
    %v385 = vld [vmem:[#allocation7 + $0x6b0] sm:$0xff]
    %v386 = vld [vmem:[#allocation7 + $0x6b8] sm:$0xff]
    %v387 = vld [vmem:[#allocation7 + $0x6f0] sm:$0xff]
    %v388 = vld [vmem:[#allocation7 + $0x6f8] sm:$0xff]
    %v389 = vld [vmem:[#allocation7 + $0x730] sm:$0xff]
    %v390 = vld [vmem:[#allocation7 + $0x738] sm:$0xff]
    %v391 = vld [vmem:[#allocation7 + $0x770] sm:$0xff]
    %v392 = vld [vmem:[#allocation7 + $0x778] sm:$0xff]
    %v393 = vld [vmem:[#allocation7 + $0x7b0] sm:$0xff]
    %v394 = vld [vmem:[#allocation7 + $0x7b8] sm:$0xff]
    %v395 = vld [vmem:[#allocation7 + $0x7f0] sm:$0xff]
    %v396 = vld [vmem:[#allocation7 + $0x7f8] sm:$0xff]
    %v397 = vld [vmem:[%s4] sm:$0x3]
    %v398 = vld [vmem:[%s4 + $0x2] sm:$0x3]
    %v399 = vld [vmem:[%s4 + $0x4] sm:$0x3]
    %v400 = vld [vmem:[%s4 + $0x6] sm:$0x3]
    %v401 = vld [vmem:[%s4 + $0x8] sm:$0x3]
    %v402 = vld [vmem:[%s4 + $0xa] sm:$0x1]
    %v403 = vld [vmem:[#allocation2] sm:$0x3]
    %v405 = vlaneseq
    %v406 = vshrl.u32 %v405, 7
    %v407 = vsub.s32 0, %v406
    %v408 = vrot.slane %v397, %v407
    %v409 = vlaneseq
    %v410 = vshrl.u32 %v409, 7
    %v411 = vsub.s32 1, %v410
    %v412 = vrot.slane %v397, %v411
    %415 = vmatprep.subr.mxu0 %v78
    %416 = vmatpush1.msra.mxu0 %v77
    %417 = vmatprep.subr.mxu0 %v80
    %418 = vmatpush1.msra.mxu0 %v79
    %419 = vmatprep.subr.mxu0 %v82
    %420 = vmatpush1.msra.mxu0 %v81
    %421 = vmatprep.subr.mxu0 %v84
    %422 = vmatpush1.msra.mxu0 %v83
    %423 = vmatprep.subr.mxu0 %v86
    %424 = vmatpush1.msra.mxu0 %v85
    %425 = vmatprep.subr.mxu0 %v88
    %426 = vmatpush1.msra.mxu0 %v87
    %427 = vmatprep.subr.mxu0 %v90
    %428 = vmatpush1.msra.mxu0 %v89
    %429 = vmatprep.subr.mxu0 %v92
    %430 = vmatpush1.msra.mxu0 %v91
    %431 = vmatprep.subr.mxu0 %v94
    %432 = vmatpush1.msra.mxu0 %v93
    %433 = vmatprep.subr.mxu0 %v96
    %434 = vmatpush1.msra.mxu0 %v95
    %435 = vmatprep.subr.mxu0 %v98
    %436 = vmatpush1.msra.mxu0 %v97
    %437 = vmatprep.subr.mxu0 %v100
    %438 = vmatpush1.msra.mxu0 %v99
    %439 = vmatprep.subr.mxu0 %v102
    %440 = vmatpush1.msra.mxu0 %v101
    %441 = vmatprep.subr.mxu0 %v104
    %442 = vmatpush1.msra.mxu0 %v103
    %443 = vmatprep.subr.mxu0 %v106
    %444 = vmatpush1.msra.mxu0 %v105
    %445 = vmatprep.subr.mxu0 %v108
    %446 = vmatpush1.msra.mxu0 %v107
    %447 = vmatprep.subr.mxu0 0.0
    %448 = vmatpush1.msra.mxu0 0.0
    %449 = vmatprep.subr.mxu0 0.0
    %450 = vmatpush1.msra.mxu0 0.0
    %451 = vmatprep.subr.mxu0 0.0
    %452 = vmatpush1.msra.mxu0 0.0
    %453 = vmatprep.subr.mxu0 0.0
    %454 = vmatpush1.msra.mxu0 0.0
    %455 = vmatprep.subr.mxu0 0.0
    %456 = vmatpush1.msra.mxu0 0.0
    %457 = vmatprep.subr.mxu0 0.0
    %458 = vmatpush1.msra.mxu0 0.0
    %459 = vmatprep.subr.mxu0 0.0
    %460 = vmatpush1.msra.mxu0 0.0
    %461 = vmatprep.subr.mxu0 0.0
    %462 = vmatpush1.msra.mxu0 0.0
    %463 = vmatprep.subr.mxu0 0.0
    %464 = vmatpush1.msra.mxu0 0.0
    %465 = vmatprep.subr.mxu0 0.0
    %466 = vmatpush1.msra.mxu0 0.0
    %467 = vmatprep.subr.mxu0 0.0
    %468 = vmatpush1.msra.mxu0 0.0
    %469 = vmatprep.subr.mxu0 0.0
    %470 = vmatpush1.msra.mxu0 0.0
    %471 = vmatprep.subr.mxu0 0.0
    %472 = vmatpush1.msra.mxu0 0.0
    %473 = vmatprep.subr.mxu0 0.0
    %474 = vmatpush1.msra.mxu0 0.0
    %475 = vmatprep.subr.mxu0 0.0
    %476 = vmatpush1.msra.mxu0 0.0
    %477 = vmatprep.subr.mxu0 0.0
    %478 = vmatpush1.msra.mxu0 0.0
    %479 = vmatprep.mubr.f32.mxu0 0.0
    %480 = vmatmul.mubr.f32.gmra.mrb[0].mxu0 %v403
    %v481 = vpop.f32.mrb[0].mxu0
    %v482 = vadd.f32 %v408, %v481
    %v483 = vpop.f32.mrb[0].mxu0
    %v484 = vadd.f32 %v412, %v483
    %485 = vdwg.mxu0
    %v486 = vmax.f32 %v482, 0.0
    %v487 = vmax.f32 %v484, 0.0
    %v489 = vlaneseq
    %v490 = vshrl.u32 %v489, 7
    %v491 = vsub.s32 0, %v490
    %v492 = vrot.slane %v398, %v491
    %v493 = vlaneseq
    %v494 = vshrl.u32 %v493, 7
    %v495 = vsub.s32 1, %v494
    %v496 = vrot.slane %v398, %v495
    %499 = vmatprep.subr.mxu0 %v142
    %500 = vmatpush1.msra.mxu0 %v141
    %501 = vmatprep.subr.mxu0 %v144
    %502 = vmatpush1.msra.mxu0 %v143
    %503 = vmatprep.subr.mxu0 %v146
    %504 = vmatpush1.msra.mxu0 %v145
    %505 = vmatprep.subr.mxu0 %v148
    %506 = vmatpush1.msra.mxu0 %v147
    %507 = vmatprep.subr.mxu0 %v150
    %508 = vmatpush1.msra.mxu0 %v149
    %509 = vmatprep.subr.mxu0 %v152
    %510 = vmatpush1.msra.mxu0 %v151
    %511 = vmatprep.subr.mxu0 %v154
    %512 = vmatpush1.msra.mxu0 %v153
    %513 = vmatprep.subr.mxu0 %v156
    %514 = vmatpush1.msra.mxu0 %v155
    %515 = vmatprep.subr.mxu0 %v158
    %516 = vmatpush1.msra.mxu0 %v157
    %517 = vmatprep.subr.mxu0 %v160
    %518 = vmatpush1.msra.mxu0 %v159
    %519 = vmatprep.subr.mxu0 %v162
    %520 = vmatpush1.msra.mxu0 %v161
    %521 = vmatprep.subr.mxu0 %v164
    %522 = vmatpush1.msra.mxu0 %v163
    %523 = vmatprep.subr.mxu0 %v166
    %524 = vmatpush1.msra.mxu0 %v165
    %525 = vmatprep.subr.mxu0 %v168
    %526 = vmatpush1.msra.mxu0 %v167
    %527 = vmatprep.subr.mxu0 %v170
    %528 = vmatpush1.msra.mxu0 %v169
    %529 = vmatprep.subr.mxu0 %v172
    %530 = vmatpush1.msra.mxu0 %v171
    %531 = vmatprep.subr.mxu0 %v174
    %532 = vmatpush1.msra.mxu0 %v173
    %533 = vmatprep.subr.mxu0 %v176
    %534 = vmatpush1.msra.mxu0 %v175
    %535 = vmatprep.subr.mxu0 %v178
    %536 = vmatpush1.msra.mxu0 %v177
    %537 = vmatprep.subr.mxu0 %v180
    %538 = vmatpush1.msra.mxu0 %v179
    %539 = vmatprep.subr.mxu0 %v182
    %540 = vmatpush1.msra.mxu0 %v181
    %541 = vmatprep.subr.mxu0 %v184
    %542 = vmatpush1.msra.mxu0 %v183
    %543 = vmatprep.subr.mxu0 %v186
    %544 = vmatpush1.msra.mxu0 %v185
    %545 = vmatprep.subr.mxu0 %v188
    %546 = vmatpush1.msra.mxu0 %v187
    %547 = vmatprep.subr.mxu0 %v190
    %548 = vmatpush1.msra.mxu0 %v189
    %549 = vmatprep.subr.mxu0 %v192
    %550 = vmatpush1.msra.mxu0 %v191
    %551 = vmatprep.subr.mxu0 %v194
    %552 = vmatpush1.msra.mxu0 %v193
    %553 = vmatprep.subr.mxu0 %v196
    %554 = vmatpush1.msra.mxu0 %v195
    %555 = vmatprep.subr.mxu0 %v198
    %556 = vmatpush1.msra.mxu0 %v197
    %557 = vmatprep.subr.mxu0 %v200
    %558 = vmatpush1.msra.mxu0 %v199
    %559 = vmatprep.subr.mxu0 %v202
    %560 = vmatpush1.msra.mxu0 %v201
    %561 = vmatprep.subr.mxu0 %v204
    %562 = vmatpush1.msra.mxu0 %v203
    %563 = vmatprep.mubr.f32.mxu0 %v487
    %564 = vmatmul.mubr.f32.gmra.mrb[0].mxu0 %v486
    %v565 = vpop.f32.mrb[0].mxu0
    %v566 = vadd.f32 %v492, %v565
    %v567 = vpop.f32.mrb[0].mxu0
    %v568 = vadd.f32 %v496, %v567
    %569 = vdwg.mxu0
    %v570 = vmax.f32 %v566, 0.0
    %v571 = vmax.f32 %v568, 0.0
    %v573 = vlaneseq
    %v574 = vshrl.u32 %v573, 7
    %v575 = vsub.s32 0, %v574
    %v576 = vrot.slane %v399, %v575
    %v577 = vlaneseq
    %v578 = vshrl.u32 %v577, 7
    %v579 = vsub.s32 1, %v578
    %v580 = vrot.slane %v399, %v579
    %583 = vmatprep.subr.mxu0 %v206
    %584 = vmatpush1.msra.mxu0 %v205
    %585 = vmatprep.subr.mxu0 %v208
    %586 = vmatpush1.msra.mxu0 %v207
    %587 = vmatprep.subr.mxu0 %v210
    %588 = vmatpush1.msra.mxu0 %v209
    %589 = vmatprep.subr.mxu0 %v212
    %590 = vmatpush1.msra.mxu0 %v211
    %591 = vmatprep.subr.mxu0 %v214
    %592 = vmatpush1.msra.mxu0 %v213
    %593 = vmatprep.subr.mxu0 %v216
    %594 = vmatpush1.msra.mxu0 %v215
    %595 = vmatprep.subr.mxu0 %v218
    %596 = vmatpush1.msra.mxu0 %v217
    %597 = vmatprep.subr.mxu0 %v220
    %598 = vmatpush1.msra.mxu0 %v219
    %599 = vmatprep.subr.mxu0 %v222
    %600 = vmatpush1.msra.mxu0 %v221
    %601 = vmatprep.subr.mxu0 %v224
    %602 = vmatpush1.msra.mxu0 %v223
    %603 = vmatprep.subr.mxu0 %v226
    %604 = vmatpush1.msra.mxu0 %v225
    %605 = vmatprep.subr.mxu0 %v228
    %606 = vmatpush1.msra.mxu0 %v227
    %607 = vmatprep.subr.mxu0 %v230
    %608 = vmatpush1.msra.mxu0 %v229
    %609 = vmatprep.subr.mxu0 %v232
    %610 = vmatpush1.msra.mxu0 %v231
    %611 = vmatprep.subr.mxu0 %v234
    %612 = vmatpush1.msra.mxu0 %v233
    %613 = vmatprep.subr.mxu0 %v236
    %614 = vmatpush1.msra.mxu0 %v235
    %615 = vmatprep.subr.mxu0 %v238
    %616 = vmatpush1.msra.mxu0 %v237
    %617 = vmatprep.subr.mxu0 %v240
    %618 = vmatpush1.msra.mxu0 %v239
    %619 = vmatprep.subr.mxu0 %v242
    %620 = vmatpush1.msra.mxu0 %v241
    %621 = vmatprep.subr.mxu0 %v244
    %622 = vmatpush1.msra.mxu0 %v243
    %623 = vmatprep.subr.mxu0 %v246
    %624 = vmatpush1.msra.mxu0 %v245
    %625 = vmatprep.subr.mxu0 %v248
    %626 = vmatpush1.msra.mxu0 %v247
    %627 = vmatprep.subr.mxu0 %v250
    %628 = vmatpush1.msra.mxu0 %v249
    %629 = vmatprep.subr.mxu0 %v252
    %630 = vmatpush1.msra.mxu0 %v251
    %631 = vmatprep.subr.mxu0 %v254
    %632 = vmatpush1.msra.mxu0 %v253
    %633 = vmatprep.subr.mxu0 %v256
    %634 = vmatpush1.msra.mxu0 %v255
    %635 = vmatprep.subr.mxu0 %v258
    %636 = vmatpush1.msra.mxu0 %v257
    %637 = vmatprep.subr.mxu0 %v260
    %638 = vmatpush1.msra.mxu0 %v259
    %639 = vmatprep.subr.mxu0 %v262
    %640 = vmatpush1.msra.mxu0 %v261
    %641 = vmatprep.subr.mxu0 %v264
    %642 = vmatpush1.msra.mxu0 %v263
    %643 = vmatprep.subr.mxu0 %v266
    %644 = vmatpush1.msra.mxu0 %v265
    %645 = vmatprep.subr.mxu0 %v268
    %646 = vmatpush1.msra.mxu0 %v267
    %647 = vmatprep.mubr.f32.mxu0 %v571
    %648 = vmatmul.mubr.f32.gmra.mrb[0].mxu0 %v570
    %v649 = vpop.f32.mrb[0].mxu0
    %v650 = vadd.f32 %v576, %v649
    %v651 = vpop.f32.mrb[0].mxu0
    %v652 = vadd.f32 %v580, %v651
    %653 = vdwg.mxu0
    %v656 = vcombine.low %v650, %v652
    %v658 = vunpack.c.l.s4 1983009808
    %v659 = vunpack.c.0.s8 %v658
    %v660 = vlaneseq
    %v661 = vshrl.u32 %v660, 7
    %v662 = vsub.s32 %v659, %v661
    %v663 = vrot.slane %v656, %v662
    %s665 = smul.u32 0, 2
    %s666 = smul.addr %s665, 2
    %s667 = scalar_lea.vmem [#allocation10], %s666
    %668 = vst [vmem:[%s667] sm:$0xf] %v663
    %v670 = vlaneseq
    %v671 = vshrl.u32 %v670, 7
    %v672 = vsub.s32 0, %v671
    %v673 = vrot.slane %v400, %v672
    %v674 = vlaneseq
    %v675 = vshrl.u32 %v674, 7
    %v676 = vsub.s32 1, %v675
    %v677 = vrot.slane %v400, %v676
    %680 = vmatprep.subr.mxu0 %v270
    %681 = vmatpush1.msra.mxu0 %v269
    %682 = vmatprep.subr.mxu0 %v272
    %683 = vmatpush1.msra.mxu0 %v271
    %684 = vmatprep.subr.mxu0 %v274
    %685 = vmatpush1.msra.mxu0 %v273
    %686 = vmatprep.subr.mxu0 %v276
    %687 = vmatpush1.msra.mxu0 %v275
    %688 = vmatprep.subr.mxu0 %v278
    %689 = vmatpush1.msra.mxu0 %v277
    %690 = vmatprep.subr.mxu0 %v280
    %691 = vmatpush1.msra.mxu0 %v279
    %692 = vmatprep.subr.mxu0 %v282
    %693 = vmatpush1.msra.mxu0 %v281
    %694 = vmatprep.subr.mxu0 %v284
    %695 = vmatpush1.msra.mxu0 %v283
    %696 = vmatprep.subr.mxu0 %v286
    %697 = vmatpush1.msra.mxu0 %v285
    %698 = vmatprep.subr.mxu0 %v288
    %699 = vmatpush1.msra.mxu0 %v287
    %700 = vmatprep.subr.mxu0 %v290
    %701 = vmatpush1.msra.mxu0 %v289
    %702 = vmatprep.subr.mxu0 %v292
    %703 = vmatpush1.msra.mxu0 %v291
    %704 = vmatprep.subr.mxu0 %v294
    %705 = vmatpush1.msra.mxu0 %v293
    %706 = vmatprep.subr.mxu0 %v296
    %707 = vmatpush1.msra.mxu0 %v295
    %708 = vmatprep.subr.mxu0 %v298
    %709 = vmatpush1.msra.mxu0 %v297
    %710 = vmatprep.subr.mxu0 %v300
    %711 = vmatpush1.msra.mxu0 %v299
    %712 = vmatprep.subr.mxu0 %v302
    %713 = vmatpush1.msra.mxu0 %v301
    %714 = vmatprep.subr.mxu0 %v304
    %715 = vmatpush1.msra.mxu0 %v303
    %716 = vmatprep.subr.mxu0 %v306
    %717 = vmatpush1.msra.mxu0 %v305
    %718 = vmatprep.subr.mxu0 %v308
    %719 = vmatpush1.msra.mxu0 %v307
    %720 = vmatprep.subr.mxu0 %v310
    %721 = vmatpush1.msra.mxu0 %v309
    %722 = vmatprep.subr.mxu0 %v312
    %723 = vmatpush1.msra.mxu0 %v311
    %724 = vmatprep.subr.mxu0 %v314
    %725 = vmatpush1.msra.mxu0 %v313
    %726 = vmatprep.subr.mxu0 %v316
    %727 = vmatpush1.msra.mxu0 %v315
    %728 = vmatprep.subr.mxu0 %v318
    %729 = vmatpush1.msra.mxu0 %v317
    %730 = vmatprep.subr.mxu0 %v320
    %731 = vmatpush1.msra.mxu0 %v319
    %732 = vmatprep.subr.mxu0 %v322
    %733 = vmatpush1.msra.mxu0 %v321
    %734 = vmatprep.subr.mxu0 %v324
    %735 = vmatpush1.msra.mxu0 %v323
    %736 = vmatprep.subr.mxu0 %v326
    %737 = vmatpush1.msra.mxu0 %v325
    %738 = vmatprep.subr.mxu0 %v328
    %739 = vmatpush1.msra.mxu0 %v327
    %740 = vmatprep.subr.mxu0 %v330
    %741 = vmatpush1.msra.mxu0 %v329
    %742 = vmatprep.subr.mxu0 %v332
    %743 = vmatpush1.msra.mxu0 %v331
    %744 = vmatprep.mubr.f32.mxu0 %v652
    %745 = vmatmul.mubr.f32.gmra.mrb[0].mxu0 %v650
    %v746 = vpop.f32.mrb[0].mxu0
    %v747 = vadd.f32 %v673, %v746
    %v748 = vpop.f32.mrb[0].mxu0
    %v749 = vadd.f32 %v677, %v748
    %750 = vdwg.mxu0
    %v751 = vmax.f32 %v747, 0.0
    %v752 = vmax.f32 %v749, 0.0
    %v754 = vlaneseq
    %v755 = vshrl.u32 %v754, 7
    %v756 = vsub.s32 0, %v755
    %v757 = vrot.slane %v401, %v756
    %v758 = vlaneseq
    %v759 = vshrl.u32 %v758, 7
    %v760 = vsub.s32 1, %v759
    %v761 = vrot.slane %v401, %v760
    %764 = vmatprep.subr.mxu0 %v334
    %765 = vmatpush1.msra.mxu0 %v333
    %766 = vmatprep.subr.mxu0 %v336
    %767 = vmatpush1.msra.mxu0 %v335
    %768 = vmatprep.subr.mxu0 %v338
    %769 = vmatpush1.msra.mxu0 %v337
    %770 = vmatprep.subr.mxu0 %v340
    %771 = vmatpush1.msra.mxu0 %v339
    %772 = vmatprep.subr.mxu0 %v342
    %773 = vmatpush1.msra.mxu0 %v341
    %774 = vmatprep.subr.mxu0 %v344
    %775 = vmatpush1.msra.mxu0 %v343
    %776 = vmatprep.subr.mxu0 %v346
    %777 = vmatpush1.msra.mxu0 %v345
    %778 = vmatprep.subr.mxu0 %v348
    %779 = vmatpush1.msra.mxu0 %v347
    %780 = vmatprep.subr.mxu0 %v350
    %781 = vmatpush1.msra.mxu0 %v349
    %782 = vmatprep.subr.mxu0 %v352
    %783 = vmatpush1.msra.mxu0 %v351
    %784 = vmatprep.subr.mxu0 %v354
    %785 = vmatpush1.msra.mxu0 %v353
    %786 = vmatprep.subr.mxu0 %v356
    %787 = vmatpush1.msra.mxu0 %v355
    %788 = vmatprep.subr.mxu0 %v358
    %789 = vmatpush1.msra.mxu0 %v357
    %790 = vmatprep.subr.mxu0 %v360
    %791 = vmatpush1.msra.mxu0 %v359
    %792 = vmatprep.subr.mxu0 %v362
    %793 = vmatpush1.msra.mxu0 %v361
    %794 = vmatprep.subr.mxu0 %v364
    %795 = vmatpush1.msra.mxu0 %v363
    %796 = vmatprep.subr.mxu0 %v366
    %797 = vmatpush1.msra.mxu0 %v365
    %798 = vmatprep.subr.mxu0 %v368
    %799 = vmatpush1.msra.mxu0 %v367
    %800 = vmatprep.subr.mxu0 %v370
    %801 = vmatpush1.msra.mxu0 %v369
    %802 = vmatprep.subr.mxu0 %v372
    %803 = vmatpush1.msra.mxu0 %v371
    %804 = vmatprep.subr.mxu0 %v374
    %805 = vmatpush1.msra.mxu0 %v373
    %806 = vmatprep.subr.mxu0 %v376
    %807 = vmatpush1.msra.mxu0 %v375
    %808 = vmatprep.subr.mxu0 %v378
    %809 = vmatpush1.msra.mxu0 %v377
    %810 = vmatprep.subr.mxu0 %v380
    %811 = vmatpush1.msra.mxu0 %v379
    %812 = vmatprep.subr.mxu0 %v382
    %813 = vmatpush1.msra.mxu0 %v381
    %814 = vmatprep.subr.mxu0 %v384
    %815 = vmatpush1.msra.mxu0 %v383
    %816 = vmatprep.subr.mxu0 %v386
    %817 = vmatpush1.msra.mxu0 %v385
    %818 = vmatprep.subr.mxu0 %v388
    %819 = vmatpush1.msra.mxu0 %v387
    %820 = vmatprep.subr.mxu0 %v390
    %821 = vmatpush1.msra.mxu0 %v389
    %822 = vmatprep.subr.mxu0 %v392
    %823 = vmatpush1.msra.mxu0 %v391
    %824 = vmatprep.subr.mxu0 %v394
    %825 = vmatpush1.msra.mxu0 %v393
    %826 = vmatprep.subr.mxu0 %v396
    %827 = vmatpush1.msra.mxu0 %v395
    %828 = vmatprep.mubr.f32.mxu0 %v752
    %829 = vmatmul.mubr.f32.gmra.mrb[0].mxu0 %v751
    %v830 = vpop.f32.mrb[0].mxu0
    %v831 = vadd.f32 %v757, %v830
    %v832 = vpop.f32.mrb[0].mxu0
    %v833 = vadd.f32 %v761, %v832
    %834 = vdwg.mxu0
    %v835 = vmax.f32 %v831, 0.0
    %v836 = vmax.f32 %v833, 0.0
    %v838 = vlaneseq
    %v839 = vshrl.u32 %v838, 7
    %v840 = vsub.s32 0, %v839
    %v841 = vrot.slane %v402, %v840
    %843 = vmatprep.subr.mxu0 0.0
    %844 = vmatpush1.msra.mxu0 %v109
    %845 = vmatprep.subr.mxu0 0.0
    %846 = vmatpush1.msra.mxu0 %v110
    %847 = vmatprep.subr.mxu0 0.0
    %848 = vmatpush1.msra.mxu0 %v111
    %849 = vmatprep.subr.mxu0 0.0
    %850 = vmatpush1.msra.mxu0 %v112
    %851 = vmatprep.subr.mxu0 0.0
    %852 = vmatpush1.msra.mxu0 %v113
    %853 = vmatprep.subr.mxu0 0.0
    %854 = vmatpush1.msra.mxu0 %v114
    %855 = vmatprep.subr.mxu0 0.0
    %856 = vmatpush1.msra.mxu0 %v115
    %857 = vmatprep.subr.mxu0 0.0
    %858 = vmatpush1.msra.mxu0 %v116
    %859 = vmatprep.subr.mxu0 0.0
    %860 = vmatpush1.msra.mxu0 %v117
    %861 = vmatprep.subr.mxu0 0.0
    %862 = vmatpush1.msra.mxu0 %v118
    %863 = vmatprep.subr.mxu0 0.0
    %864 = vmatpush1.msra.mxu0 %v119
    %865 = vmatprep.subr.mxu0 0.0
    %866 = vmatpush1.msra.mxu0 %v120
    %867 = vmatprep.subr.mxu0 0.0
    %868 = vmatpush1.msra.mxu0 %v121
    %869 = vmatprep.subr.mxu0 0.0
    %870 = vmatpush1.msra.mxu0 %v122
    %871 = vmatprep.subr.mxu0 0.0
    %872 = vmatpush1.msra.mxu0 %v123
    %873 = vmatprep.subr.mxu0 0.0
    %874 = vmatpush1.msra.mxu0 %v124
    %875 = vmatprep.subr.mxu0 0.0
    %876 = vmatpush1.msra.mxu0 %v125
    %877 = vmatprep.subr.mxu0 0.0
    %878 = vmatpush1.msra.mxu0 %v126
    %879 = vmatprep.subr.mxu0 0.0
    %880 = vmatpush1.msra.mxu0 %v127
    %881 = vmatprep.subr.mxu0 0.0
    %882 = vmatpush1.msra.mxu0 %v128
    %883 = vmatprep.subr.mxu0 0.0
    %884 = vmatpush1.msra.mxu0 %v129
    %885 = vmatprep.subr.mxu0 0.0
    %886 = vmatpush1.msra.mxu0 %v130
    %887 = vmatprep.subr.mxu0 0.0
    %888 = vmatpush1.msra.mxu0 %v131
    %889 = vmatprep.subr.mxu0 0.0
    %890 = vmatpush1.msra.mxu0 %v132
    %891 = vmatprep.subr.mxu0 0.0
    %892 = vmatpush1.msra.mxu0 %v133
    %893 = vmatprep.subr.mxu0 0.0
    %894 = vmatpush1.msra.mxu0 %v134
    %895 = vmatprep.subr.mxu0 0.0
    %896 = vmatpush1.msra.mxu0 %v135
    %897 = vmatprep.subr.mxu0 0.0
    %898 = vmatpush1.msra.mxu0 %v136
    %899 = vmatprep.subr.mxu0 0.0
    %900 = vmatpush1.msra.mxu0 %v137
    %901 = vmatprep.subr.mxu0 0.0
    %902 = vmatpush1.msra.mxu0 %v138
    %903 = vmatprep.subr.mxu0 0.0
    %904 = vmatpush1.msra.mxu0 %v139
    %905 = vmatprep.subr.mxu0 0.0
    %906 = vmatpush1.msra.mxu0 %v140
    %907 = vmatprep.mubr.f32.mxu0 %v836
    %908 = vmatmul.mubr.f32.gmra.mrb[0].mxu0 %v835
    %v909 = vpop.f32.mrb[0].mxu0
    %v910 = vadd.f32 %v841, %v909
    %v911 = vpop.f32.mrb[0].mxu0
    %912 = vdwg.mxu0
    %913 = vst [vmem:[#allocation11] sm:$0x3] %v910
    // Predicated region
    $region38: #{tpu_custom_call.1} parent=1 // pred_check
      _
    $region39: #{tpu_custom_call.1} parent=1 // pred_check_branch
      %915 = sbr.rel (0) target = $region41
    $region40: #{tpu_custom_call.1} parent=1 // pred_region
      %s917 = ssub.s32 64, 64
      %918 = vsyncadd [#allocation4], %s917
      %s920 = sshll.u32 [#allocation10], 4
      %s921 = int_to_ptr.vmem [resolvable:$true] %s920
      %923 = dma.vmem_to_hbm [thread:$0]  %s921, 64, %s5, [#allocation4]
    $region41: #{tpu_custom_call.1} parent=1 // pred_fallthru
      _
    // Predicated region
    $region42: #{tpu_custom_call.1} parent=1 // pred_check
      _
    $region43: #{tpu_custom_call.1} parent=1 // pred_check_branch
      %925 = sbr.rel (0) target = $region45
    $region44: #{tpu_custom_call.1} parent=1 // pred_region
      %s927 = ssub.s32 32, 32
      %928 = vsyncadd [#allocation12], %s927
      %s930 = sshll.u32 [#allocation11], 4
      %s931 = int_to_ptr.vmem [resolvable:$true] %s930
      %933 = dma.vmem_to_hbm [thread:$0]  %s931, 32, %s6, [#allocation12]
    $region45: #{tpu_custom_call.1} parent=1 // pred_fallthru
      _
    // Predicated region
    $region46: #{tpu_custom_call.1} parent=1 // pred_check
      _
    $region47: #{tpu_custom_call.1} parent=1 // pred_check_branch
      %935 = sbr.rel (0) target = $region49
    $region48: #{tpu_custom_call.1} parent=1 // pred_region
      %936 = dma.done [#allocation4], 64
    $region49: #{tpu_custom_call.1} parent=1 // pred_fallthru
      _
    // Predicated region
    $region50: #{tpu_custom_call.1} parent=1 // pred_check
      _
    $region51: #{tpu_custom_call.1} parent=1 // pred_check_branch
      %938 = sbr.rel (0) target = $region53
    $region52: #{tpu_custom_call.1} parent=1 // pred_region
      %939 = dma.done [#allocation12], 32
    $region53: #{tpu_custom_call.1} parent=1 // pred_fallthru
      _
    %940 = vsyncpa [#allocation3], 1
    %941 = vsyncpa [#allocation6], 1
    %942 = vsyncpa [#allocation9], 1
    %943 = vsyncpa [#allocation4], 1
    %944 = vsyncpa [#allocation12], 1

</llo_original>
